<compile_context>
chip_gen: v6e
topology: v6e:2x2x1
jax: 0.10.0
libtpu: 0.0.40
codegen_flags: <defaults>
</compile_context>

<pallas_src>
import functools
import math

import jax
import jax.numpy as jnp
from jax import lax
from jax.experimental import pallas as pl
from jax.experimental.pallas import tpu as pltpu


def awing_kernel(yp_ref, y_ref, out_ref, acc_ref, *, alpha, omega, theta,
                 ln_r, inv_eps, a_const, inv_hw, c_tile, n_channels,
                 blocks_per_core, needs_mask):
    c_blk = pl.program_id(1)

    @pl.when(c_blk == 0)
    def _init():
        acc_ref[...] = jnp.zeros_like(acc_ref)

    # Block is (1, c_tile, H*W); squeeze the batch dim at load time.
    # Keep all transcendental math in f32 (no bf16 EUP path on v5e).
    yp = yp_ref[0].astype(jnp.float32)                 # (c_tile, HW)
    yt = y_ref[0].astype(jnp.float32)                  # (c_tile, HW)

    d = jnp.abs(yt - yp)
    e = alpha - yt                                     # target-only path (>0 for heatmap targets)
    pow_r = jnp.exp(e * ln_r)                          # (theta/eps)**e   (1 EUP exp)
    one_p = 1.0 + pow_r
    inv_1p = pl.reciprocal(one_p, approx=True)         # cheap EUP rcp
    inv_1p = inv_1p * (2.0 - one_p * inv_1p)           # Newton step (VPU) -> ~f32 exact
    # A = omega * inv_1p * e * r**(e-1) / eps == (omega/theta) * inv_1p * e * pow_r
    A = (a_const * inv_1p) * (e * pow_r)
    C = theta * A - omega * jnp.log(one_p)

    # case1: omega * log(1 + (d/eps)**e) via exp/log; clamp d so log(0) is
    # safe (pow(0, e>0) == 0 either way, result unchanged).  Assumes e > 0,
    # i.e. targets < alpha, as in the module's intended heatmap use.
    d_safe = jnp.maximum(d, 1e-30)
    case1 = omega * jnp.log(1.0 + jnp.exp(e * jnp.log(d_safe * inv_eps)))
    case2 = A * d - C
    loss_mat = jnp.where(d < theta, case1, case2)

    if needs_mask:
        # Ragged last channel block and/or padded (clamped) grid blocks:
        # zero contributions from channels >= n_channels.  Padded input
        # values are undefined, but the select discards them (NaN/Inf in
        # masked positions never reaches the accumulator).
        blk = pl.program_id(0) * blocks_per_core + c_blk
        ch = blk * c_tile + lax.broadcasted_iota(jnp.int32, loss_mat.shape, 0)
        loss_mat = jnp.where(ch < n_channels, loss_mat, 0.0)

    # Pure-VPU elementwise accumulate; no cross-lane work per grid step.
    acc_ref[...] += loss_mat

    # Single XLU tree-reduce + scale + store, once per core.
    @pl.when(c_blk == pl.num_programs(1) - 1)
    def _finalize():
        # sum_c mean_{hw} == sum_all / HW (same HW per channel).
        total = jnp.sum(acc_ref[...]) * inv_hw
        out_ref[...] = jnp.full(out_ref.shape, total, dtype=jnp.float32)


def _pick_c_tile(C, HW, bytes_per_elem=4, budget_bytes=4 * 1024 * 1024,
                 min_steps=4):
    """Channels per block, budgeting *padded* VMEM bytes.

    The lane axis pads to a multiple of 128 (and the channel/sublane axis to
    a multiple of 8), so the budget is computed on padded bytes.  4 MiB/block
    keeps 2 inputs x 2 pipeline buffers + the f32 scratch accumulator well
    under the 32 MiB scoped VMEM limit requested below (safe on v5e/v6e/v7x).
    The tile is also capped so the channel grid keeps >= min_steps steps when
    C allows, preserving DMA/compute overlap.  c_tile must be a multiple of 8
    or equal to C (sublane constraint on the second-to-last block dim), but it
    need NOT divide C — ragged blocks are masked in the kernel.
    """
    hw_pad = -(-HW // 128) * 128
    row_bytes = hw_pad * bytes_per_elem
    max_by_vmem = max(1, budget_bytes // row_bytes)
    max_by_steps = max(1, -(-C // min_steps))
    cap = min(max_by_vmem, max_by_steps)
    if cap >= C:
        return C
    c_tile = (cap // 8) * 8
    if c_tile == 0:
        # Either C < 8 (full — and therefore legal — channel dim) or a huge
        # per-channel map forces the minimum legal 8-row tile.
        # TODO(synk): also tile the H*W axis for per-channel maps > ~1 Mi elems.
        c_tile = min(C, 8)
    return c_tile


def awing_loss(y_pred, y, alpha=2.1, omega=14.0, epsilon=1.0, theta=0.5):
    N, C, H, W = y_pred.shape
    HW = H * W
    # Metadata-only reshape of contiguous trailing dims -> lane-dense blocks.
    yp2 = y_pred.reshape(N, C, HW)
    yt2 = y.reshape(N, C, HW)

    c_tile = _pick_c_tile(C, HW)
    n_blocks = pl.cdiv(C, c_tile)
    # Leading "parallel" axis shards the channel reduction across the 2
    # TensorCores on v7x; it simply iterates (no-op) on v5e/v6e.
    n_cores = 2 if n_blocks >= 2 else 1
    blocks_per_core = pl.cdiv(n_blocks, n_cores)
    padded_grid = n_cores * blocks_per_core != n_blocks
    needs_mask = n_cores * blocks_per_core * c_tile != C

    def in_map(p, c):
        blk = p * blocks_per_core + c
        if padded_grid:
            blk = jnp.minimum(blk, n_blocks - 1)   # keep the DMA window in bounds
        return (0, blk, 0)                          # batch-0 selection here

    kernel = functools.partial(
        awing_kernel,
        alpha=float(alpha),
        omega=float(omega),
        theta=float(theta),
        ln_r=float(math.log(theta / epsilon)),
        inv_eps=float(1.0 / epsilon),
        a_const=float(omega / theta),
        inv_hw=float(1.0 / HW),
        c_tile=c_tile,
        n_channels=C,
        blocks_per_core=blocks_per_core,
        needs_mask=needs_mask,
    )

    elems = C * HW
    partials = pl.pallas_call(
        kernel,
        out_shape=jax.ShapeDtypeStruct((n_cores, 8, 128), jnp.float32),
        grid=(n_cores, blocks_per_core),
        in_specs=[
            # Last two block dims: (c_tile, HW). c_tile is a multiple of 8 or
            # == C; HW is the full last dim, so any H, W is legal.
            pl.BlockSpec((1, c_tile, HW), in_map),
            pl.BlockSpec((1, c_tile, HW), in_map),
        ],
        out_specs=pl.BlockSpec((1, 8, 128), lambda p, c: (p, 0, 0)),
        scratch_shapes=[pltpu.VMEM((c_tile, HW), jnp.float32)],
        compiler_params=pltpu.CompilerParams(
            dimension_semantics=("parallel", "arbitrary"),
            vmem_limit_bytes=32 * 1024 * 1024),
        cost_estimate=pl.CostEstimate(
            flops=20 * elems,
            transcendentals=5 * elems,
            bytes_accessed=2 * elems * y_pred.dtype.itemsize
                           + n_cores * 8 * 128 * 4),
    )(yp2, yt2)
    # Per-core partial sums (each broadcast across its 8x128 output tile).
    return partials[:, 0, 0].sum()


def awing_ref(y_pred, y, alpha=2.1, omega=14.0, epsilon=1.0, theta=0.5):
    """Pure-JAX reference matching the PyTorch forward exactly."""
    yp = y_pred[0].astype(jnp.float32)
    yt = y[0].astype(jnp.float32)
    d = jnp.abs(yt - yp)
    r = theta / epsilon
    e = alpha - yt
    pow_r = r ** e
    A = omega * (1.0 / (1.0 + pow_r)) * e * r ** (e - 1.0) / epsilon
    Cc = theta * A - omega * jnp.log(1.0 + pow_r)
    lm = jnp.where(d < theta,
                   omega * jnp.log(1.0 + (d / epsilon) ** e),
                   A * d - Cc)
    return jnp.sum(jnp.mean(lm, axis=(1, 2)))


if __name__ == "__main__":
    key = jax.random.PRNGKey(0)
    k1, k2 = jax.random.split(key)

    # Canonical small test (heatmap-like targets/predictions in [0, 1]).
    N, C, H, W = 2, 4, 16, 16
    y_pred = jax.random.uniform(k1, (N, C, H, W), dtype=jnp.float32)
    y = jax.random.uniform(k2, (N, C, H, W), dtype=jnp.float32)
    loss = awing_loss(y_pred, y)
    jax.block_until_ready(loss)
    ref = awing_ref(y_pred, y)
    assert jnp.allclose(loss, ref, rtol=1e-4, atol=1e-4), (loss, ref)

    # Ragged-channel test: exercises the cdiv grid, index clamping, channel
    # masking, and the 2-way parallel split with multi-step accumulation.
    k3, k4 = jax.random.split(k1)
    y_pred2 = jax.random.uniform(k3, (2, 20, 16, 16), dtype=jnp.float32)
    y2 = jax.random.uniform(k4, (2, 20, 16, 16), dtype=jnp.float32)
    loss2 = awing_loss(y_pred2, y2)
    jax.block_until_ready(loss2)
    ref2 = awing_ref(y_pred2, y2)
    assert jnp.allclose(loss2, ref2, rtol=1e-4, atol=1e-4), (loss2, ref2)

    print("KERNEL_OK")
</pallas_src>

<mosaic_0001>
module attributes {stable_mosaic.version = 11 : i64} {
  func.func @awing_kernel(%arg0: i32, %arg1: i32, %arg2: memref<1x4x256xf32, #tpu.memory_space<vmem>>, %arg3: memref<1x4x256xf32, #tpu.memory_space<vmem>>, %arg4: memref<1x8x128xf32, #tpu.memory_space<vmem>>, %arg5: memref<4x256xf32, #tpu.memory_space<vmem>>) attributes {dimension_semantics = [#tpu.dimension_semantics<parallel>, #tpu.dimension_semantics<arbitrary>], iteration_bounds = array<i64: 1, 1>, scalar_prefetch = 0 : i64, scratch_operands = 1 : i64, tpu.core_type = #tpu.core_type<tc>, window_params = [{transform_indices = @transform_0, window_bounds = array<i64: 1, 4, 256>}, {transform_indices = @transform_1, window_bounds = array<i64: 1, 4, 256>}, {transform_indices = @transform_2, window_bounds = array<i64: 1, 8, 128>}]} {
    %c0_i32 = arith.constant 0 : i32
    %0 = arith.cmpi eq, %arg1, %c0_i32 : i32
    %1 = arith.extui %0 : i1 to i32
    %c0_i32_0 = arith.constant 0 : i32
    %2 = arith.cmpi ne, %1, %c0_i32_0 : i32
    scf.if %2 {
      %cst_23 = arith.constant 0.000000e+00 : f32
      %54 = vector.broadcast %cst_23 : f32 to vector<4x256xf32>
      %c0_24 = arith.constant 0 : index
      %c0_25 = arith.constant 0 : index
      %55 = vector.load %arg5[%c0_24, %c0_25] : memref<4x256xf32, #tpu.memory_space<vmem>>, vector<4x256xf32>
      tpu.vector_store %arg5[%c0_24, %c0_25], %54 {strides = array<i32>} : memref<4x256xf32, #tpu.memory_space<vmem>>, vector<4x256xf32>,
    } else {
    }
    %c0 = arith.constant 0 : index
    %c0_1 = arith.constant 0 : index
    %c0_2 = arith.constant 0 : index
    %3 = vector.load %arg2[%c0, %c0_1, %c0_2] : memref<1x4x256xf32, #tpu.memory_space<vmem>>, vector<1x4x256xf32>
    %4 = vector.shape_cast %3 : vector<1x4x256xf32> to vector<4x256xf32>
    %c0_3 = arith.constant 0 : index
    %c0_4 = arith.constant 0 : index
    %c0_5 = arith.constant 0 : index
    %5 = vector.load %arg3[%c0_3, %c0_4, %c0_5] : memref<1x4x256xf32, #tpu.memory_space<vmem>>, vector<1x4x256xf32>
    %6 = vector.shape_cast %5 : vector<1x4x256xf32> to vector<4x256xf32>
    %7 = arith.subf %6, %4 : vector<4x256xf32>
    %8 = math.absf %7 : vector<4x256xf32>
    %cst = arith.constant 2.100000e+00 : f32
    %9 = vector.broadcast %cst : f32 to vector<4x256xf32>
    %10 = arith.subf %9, %6 : vector<4x256xf32>
    %cst_6 = arith.constant -0.693147182 : f32
    %11 = vector.broadcast %cst_6 : f32 to vector<4x256xf32>
    %12 = arith.mulf %10, %11 : vector<4x256xf32>
    %13 = math.exp %12 : vector<4x256xf32>
    %cst_7 = arith.constant 1.000000e+00 : f32
    %14 = vector.broadcast %cst_7 : f32 to vector<4x256xf32>
    %15 = arith.addf %14, %13 : vector<4x256xf32>
    %16 = tpu.reciprocal %15 {approx = true} : vector<4x256xf32> -> vector<4x256xf32>
    %17 = arith.mulf %15, %16 : vector<4x256xf32>
    %cst_8 = arith.constant 2.000000e+00 : f32
    %18 = vector.broadcast %cst_8 : f32 to vector<4x256xf32>
    %19 = arith.subf %18, %17 : vector<4x256xf32>
    %20 = arith.mulf %16, %19 : vector<4x256xf32>
    %cst_9 = arith.constant 2.800000e+01 : f32
    %21 = vector.broadcast %cst_9 : f32 to vector<4x256xf32>
    %22 = arith.mulf %21, %20 : vector<4x256xf32>
    %23 = arith.mulf %10, %13 : vector<4x256xf32>
    %24 = arith.mulf %22, %23 : vector<4x256xf32>
    %cst_10 = arith.constant 5.000000e-01 : f32
    %25 = vector.broadcast %cst_10 : f32 to vector<4x256xf32>
    %26 = arith.mulf %25, %24 : vector<4x256xf32>
    %27 = math.log %15 : vector<4x256xf32>
    %cst_11 = arith.constant 1.400000e+01 : f32
    %28 = vector.broadcast %cst_11 : f32 to vector<4x256xf32>
    %29 = arith.mulf %28, %27 : vector<4x256xf32>
    %30 = arith.subf %26, %29 : vector<4x256xf32>
    %cst_12 = arith.constant 1.000000e-30 : f32
    %31 = vector.broadcast %cst_12 : f32 to vector<4x256xf32>
    %32 = arith.maximumf %8, %31 : vector<4x256xf32>
    %cst_13 = arith.constant 1.000000e+00 : f32
    %33 = vector.broadcast %cst_13 : f32 to vector<4x256xf32>
    %34 = arith.mulf %32, %33 : vector<4x256xf32>
    %35 = math.log %34 : vector<4x256xf32>
    %36 = arith.mulf %10, %35 : vector<4x256xf32>
    %37 = math.exp %36 : vector<4x256xf32>
    %cst_14 = arith.constant 1.000000e+00 : f32
    %38 = vector.broadcast %cst_14 : f32 to vector<4x256xf32>
    %39 = arith.addf %38, %37 : vector<4x256xf32>
    %40 = math.log %39 : vector<4x256xf32>
    %cst_15 = arith.constant 1.400000e+01 : f32
    %41 = vector.broadcast %cst_15 : f32 to vector<4x256xf32>
    %42 = arith.mulf %41, %40 : vector<4x256xf32>
    %43 = arith.mulf %24, %8 : vector<4x256xf32>
    %44 = arith.subf %43, %30 : vector<4x256xf32>
    %cst_16 = arith.constant 5.000000e-01 : f32
    %45 = vector.broadcast %cst_16 : f32 to vector<4x256xf32>
    %46 = arith.cmpf olt, %8, %45 : vector<4x256xf32>
    %47 = arith.select %46, %42, %44 : vector<4x256xi1>, vector<4x256xf32>
    %c0_17 = arith.constant 0 : index
    %c0_18 = arith.constant 0 : index
    %48 = vector.load %arg5[%c0_17, %c0_18] : memref<4x256xf32, #tpu.memory_space<vmem>>, vector<4x256xf32>
    %49 = arith.addf %48, %47 : vector<4x256xf32>
    %c0_19 = arith.constant 0 : index
    %c0_20 = arith.constant 0 : index
    %50 = vector.load %arg5[%c0_19, %c0_20] : memref<4x256xf32, #tpu.memory_space<vmem>>, vector<4x256xf32>
    tpu.vector_store %arg5[%c0_19, %c0_20], %49 {strides = array<i32>} : memref<4x256xf32, #tpu.memory_space<vmem>>, vector<4x256xf32>,
    %c0_i32_21 = arith.constant 0 : i32
    %51 = arith.cmpi eq, %arg1, %c0_i32_21 : i32
    %52 = arith.extui %51 : i1 to i32
    %c0_i32_22 = arith.constant 0 : i32
    %53 = arith.cmpi ne, %52, %c0_i32_22 : i32
    scf.if %53 {
      %c0_23 = arith.constant 0 : index
      %c0_24 = arith.constant 0 : index
      %54 = vector.load %arg5[%c0_23, %c0_24] : memref<4x256xf32, #tpu.memory_space<vmem>>, vector<4x256xf32>
      %55 = vector.shape_cast %54 : vector<4x256xf32> to vector<1x4x256xf32>
      %cst_25 = arith.constant dense<0.000000e+00> : vector<1xf32>
      %56 = vector.multi_reduction <add>, %55, %cst_25 [1, 2] : vector<1x4x256xf32> to vector<1xf32>
      %57 = vector.shape_cast %56 : vector<1xf32> to vector<1x1x1xf32>
      %58 = vector.extract %57[0, 0, 0] : f32 from vector<1x1x1xf32>
      %cst_26 = arith.constant 3.906250e-03 : f32
      %59 = arith.mulf %58, %cst_26 : f32
      %60 = vector.broadcast %59 : f32 to vector<1x8x128xf32>
      %c0_27 = arith.constant 0 : index
      %c0_28 = arith.constant 0 : index
      %c0_29 = arith.constant 0 : index
      %61 = vector.load %arg4[%c0_27, %c0_28, %c0_29] : memref<1x8x128xf32, #tpu.memory_space<vmem>>, vector<1x8x128xf32>
      tpu.vector_store %arg4[%c0_27, %c0_28, %c0_29], %60 {strides = array<i32>} : memref<1x8x128xf32, #tpu.memory_space<vmem>>, vector<1x8x128xf32>,
    } else {
    }
    return
  }
  func.func @transform_0(%arg0: i32, %arg1: i32) -> (i32, i32, i32) {
    %c1_i32 = arith.constant 1 : i32
    %0 = arith.muli %arg0, %c1_i32 : i32
    %1 = arith.addi %0, %arg1 : i32
    %c0_i32 = arith.constant 0 : i32
    %c0_i32_0 = arith.constant 0 : i32
    %c0_i32_1 = arith.constant 0 : i32
    return %c0_i32, %1, %c0_i32_0 : i32, i32, i32
  }
  func.func @transform_1(%arg0: i32, %arg1: i32) -> (i32, i32, i32) {
    %c1_i32 = arith.constant 1 : i32
    %0 = arith.muli %arg0, %c1_i32 : i32
    %1 = arith.addi %0, %arg1 : i32
    %c0_i32 = arith.constant 0 : i32
    %c0_i32_0 = arith.constant 0 : i32
    %c0_i32_1 = arith.constant 0 : i32
    return %c0_i32, %1, %c0_i32_0 : i32, i32, i32
  }
  func.func @transform_2(%arg0: i32, %arg1: i32) -> (i32, i32, i32) {
    %c0_i32 = arith.constant 0 : i32
    %c0_i32_0 = arith.constant 0 : i32
    %c0_i32_1 = arith.constant 0 : i32
    return %arg0, %c0_i32, %c0_i32_0 : i32, i32, i32
  }
}

</mosaic_0001>

<llo_original>
// kernel: tpu_custom_call.1
$region0: #{tpu_custom_call.1}
  #allocation0 [shape = 'u32[]', space=smem, size = 0x4, offset = 0x4, fixed_abs, tag = 'smem constant byte address 0x4 - core index']
  #allocation1 [shape = 'u32[144,128]{1,0:T(1,128)}', space=vmem, size = 0x12000, scoped, tag = 'internal scratch']
  #allocation2 [shape = 'f32[4,256]{1,0:T(4,128)}', space=vmem, size = 0x1000, scoped, tag = 'scratch operand']
  %s0 = inlined_call_operand.hbm [shape: f32[2,4,256], index: 0, kind: input, shape index: {}]
  %s1 = inlined_call_operand.hbm [shape: f32[2,4,256], index: 1, kind: input, shape index: {}]
  %s2 = inlined_call_operand.hbm [shape: f32[1,8,128], index: 2, kind: output, shape index: {}]
  %s3 = sld [smem:[#allocation0]]
  $region34: #{tpu_custom_call.1} parent=0
    _
  %s5 = ssub.s32 1, %s3
  %s6 = scalar_select 0, %s5, %s3
  $region1: #{tpu_custom_call.1} parent=0
    #allocation3 [shape = 'u8[4096]{0}', space=vmem, size = 0x1000, scoped, tag = 'input window, operand 0, single buffered']
    #allocation4 [shape = 's32[1]{0}', space=sflag, size = 0x4, scoped, tag = 'scoped memory for tpu_custom_call.1']
    #allocation5 [shape = 's32[1]{0}', space=sflag, size = 0x4, scoped, tag = 'scoped memory for tpu_custom_call.1']
    #allocation6 [shape = 'u8[4096]{0}', space=vmem, size = 0x1000, scoped, tag = 'input window, operand 1, single buffered']
    #allocation7 [shape = 's32[1]{0}', space=sflag, size = 0x4, scoped, tag = 'scoped memory for tpu_custom_call.1']
    #allocation8 [shape = 'u8[4096]{0}', space=vmem, size = 0x1000, scoped, tag = 'output window, operand 0, single buffered']
    %7 = vsyncpa [#allocation4], 0
    %8 = vsyncpa [#allocation7], 0
    %9 = vsyncpa [#allocation5], 0
    // Predicated region
    $region2: #{tpu_custom_call.1} parent=1 // pred_check
      _
    $region3: #{tpu_custom_call.1} parent=1 // pred_check_branch
      %11 = sbr.rel (0) target = $region5
    $region4: #{tpu_custom_call.1} parent=1 // pred_region
      %s12 = sadd.s32 0, 0
      %s14 = ssub.s32 128, 128
      %15 = vsyncadd [#allocation4], %s14
      %s16 = smul.addr %s12, 2
      %s17 = smul.addr %s16, 64
      %s18 = scalar_lea.hbm %s0, %s17
      %s20 = sshll.u32 [#allocation3], 4
      %s21 = int_to_ptr.vmem [resolvable:$true] %s20
      %23 = dma.hbm_to_vmem [thread:$0]  %s18, 128, %s21, [#allocation4]
    $region5: #{tpu_custom_call.1} parent=1 // pred_fallthru
      _
    // Predicated region
    $region6: #{tpu_custom_call.1} parent=1 // pred_check
      _
    $region7: #{tpu_custom_call.1} parent=1 // pred_check_branch
      %25 = sbr.rel (0) target = $region9
    $region8: #{tpu_custom_call.1} parent=1 // pred_region
      %s26 = sadd.s32 0, 0
      %s28 = ssub.s32 128, 128
      %29 = vsyncadd [#allocation7], %s28
      %s30 = smul.addr %s26, 2
      %s31 = smul.addr %s30, 64
      %s32 = scalar_lea.hbm %s1, %s31
      %s34 = sshll.u32 [#allocation6], 4
      %s35 = int_to_ptr.vmem [resolvable:$true] %s34
      %37 = dma.hbm_to_vmem [thread:$0]  %s32, 128, %s35, [#allocation7]
    $region9: #{tpu_custom_call.1} parent=1 // pred_fallthru
      _
    // Predicated region
    $region10: #{tpu_custom_call.1} parent=1 // pred_check
      _
    $region11: #{tpu_custom_call.1} parent=1 // pred_check_branch
      %39 = sbr.rel (0) target = $region13
    $region12: #{tpu_custom_call.1} parent=1 // pred_region
      %40 = dma.done [#allocation4], 128
    $region13: #{tpu_custom_call.1} parent=1 // pred_fallthru
      _
    // Predicated region
    $region14: #{tpu_custom_call.1} parent=1 // pred_check
      _
    $region15: #{tpu_custom_call.1} parent=1 // pred_check_branch
      %42 = sbr.rel (0) target = $region17
    $region16: #{tpu_custom_call.1} parent=1 // pred_region
      %43 = dma.done [#allocation7], 128
    $region17: #{tpu_custom_call.1} parent=1 // pred_fallthru
      _
    %s44 = sadd.s32 0, 0
    %s45 = sadd.s32 0, 0
    %p46 = scmp.eq.s32.totalorder 0, 0
    // Predicated region
    $region18: #{tpu_custom_call.1} parent=1 // pred_check
      %p47 = pneg %p46
    $region19: #{tpu_custom_call.1} parent=1 // pred_check_branch
      %49 = sbr.rel (%p47) target = $region21
    $region20: #{tpu_custom_call.1} parent=1 // pred_region
      %50 = vst [vmem:[#allocation2] sm:$0xff] 0.0
    $region21: #{tpu_custom_call.1} parent=1 // pred_fallthru
      _
    %v51 = vld [vmem:[#allocation3] sm:$0xff]
    %v52 = vld [vmem:[#allocation6] sm:$0xff]
    %v53 = vsub.f32 %v52, %v51
    %v54 = vand.u32 2147483647, %v53
    %v55 = vsub.f32 2.1, %v52
    %v56 = vmul.f32 %v55, -0.6931472
    %v57 = vmul.f32 %v56, 1.442695
    %v58 = vpow.pop %v57
    %v59 = vadd.f32 %v58, 1.0
    %v60 = vrcp.pop %v59
    %v61 = vmul.f32 %v59, %v60
    %v62 = vsub.f32 2.0, %v61
    %v63 = vmul.f32 %v60, %v62
    %v64 = vmul.f32 %v63, 28.0
    %v65 = vmul.f32 %v55, %v58
    %v66 = vmul.f32 %v64, %v65
    %v67 = vmul.f32 %v66, 0.5
    %v68 = vlog2.pop %v59
    %v69 = vmul.f32 %v68, 0.6931472
    %v70 = vmul.f32 %v69, 14.0
    %v71 = vsub.f32 %v67, %v70
    %v72 = vmax.f32 %v54, 1e-30
    %v73 = vlog2.pop %v72
    %v74 = vmul.f32 %v73, 0.6931472
    %v75 = vmul.f32 %v55, %v74
    %v76 = vmul.f32 %v75, 1.442695
    %v77 = vpow.pop %v76
    %v78 = vadd.f32 %v77, 1.0
    %v79 = vlog2.pop %v78
    %v80 = vmul.f32 %v79, 0.6931472
    %v81 = vmul.f32 %v80, 14.0
    %v82 = vmul.f32 %v66, %v54
    %v83 = vsub.f32 %v82, %v71
    %vm84 = vcmp.lt.f32.partialorder %v54, 0.5
    %v85 = vsel %vm84, %v81, %v83
    %v86 = vld [vmem:[#allocation2] sm:$0xff]
    %v87 = vadd.f32 %v86, %v85
    %88 = vst [vmem:[#allocation2] sm:$0xff] %v87
    // Predicated region
    $region22: #{tpu_custom_call.1} parent=1 // pred_check
      %p89 = pneg %p46
    $region23: #{tpu_custom_call.1} parent=1 // pred_check_branch
      %91 = sbr.rel (%p89) target = $region25
    $region24: #{tpu_custom_call.1} parent=1 // pred_region
      %v92 = vld [vmem:[#allocation2] sm:$0xff]
      %v94 = vcombine.high %v92, %v92
      %vm96 = vcmask 1043456
      %v97 = vsel %vm96, %v92, 0.0
      %v98 = vsel %vm96, %v94, 0.0
      %v99 = vadd.f32 %v97, %v98
      %100 = vadd.xlane.f32.xlu0 %v99
      %v101 = vpop.xlane.xlu0 %100
      %v102 = vrot.slane %v101, 4
      %v103 = vadd.f32 %v101, %v102
      %v104 = vrot.slane %v103, 2
      %v105 = vadd.f32 %v103, %v104
      %v106 = vrot.slane %v105, 1
      %v107 = vadd.f32 %v105, %v106
      %s108 = vtos %v107
      %s109 = smul.f32 %s108, 0.00390625
      %v110 = vstv %s109
      %111 = vst [vmem:[#allocation8] sm:$0xff] %v110
    $region25: #{tpu_custom_call.1} parent=1 // pred_fallthru
      _
    // Predicated region
    $region26: #{tpu_custom_call.1} parent=1 // pred_check
      _
    $region27: #{tpu_custom_call.1} parent=1 // pred_check_branch
      %113 = sbr.rel (0) target = $region29
    $region28: #{tpu_custom_call.1} parent=1 // pred_region
      %s115 = ssub.s32 128, 128
      %116 = vsyncadd [#allocation5], %s115
      %s118 = sshll.u32 [#allocation8], 4
      %s119 = int_to_ptr.vmem [resolvable:$true] %s118
      %121 = dma.vmem_to_hbm [thread:$0]  %s119, 128, %s2, [#allocation5]
    $region29: #{tpu_custom_call.1} parent=1 // pred_fallthru
      _
    // Predicated region
    $region30: #{tpu_custom_call.1} parent=1 // pred_check
      _
    $region31: #{tpu_custom_call.1} parent=1 // pred_check_branch
      %123 = sbr.rel (0) target = $region33
    $region32: #{tpu_custom_call.1} parent=1 // pred_region
      %124 = dma.done [#allocation5], 128
    $region33: #{tpu_custom_call.1} parent=1 // pred_fallthru
      _
    %125 = vsyncpa [#allocation4], 1
    %126 = vsyncpa [#allocation7], 1
    %127 = vsyncpa [#allocation5], 1

</llo_original>
